<compile_context>
chip_gen: v7x
topology: tpu7x:2x2x1
jax: 0.10.0
libtpu: 0.0.40
codegen_flags: <defaults>
</compile_context>

<pallas_src>
import jax
import jax.numpy as jnp
from jax.experimental import pallas as pl
from jax.experimental.pallas import tpu as pltpu


def _round_up(x: int, m: int) -> int:
    return (x + m - 1) // m * m


def _choose_tile_b(B: int, cap: int = 512) -> int:
    """Batch tile: multiple of 8, as large as the cap allows, but split into
    at least 2 tiles when the padded batch permits so the "parallel" grid axis
    can shard across both TensorCores on v7x (no effect on v5e/v6e)."""
    B8 = _round_up(max(B, 1), 8)
    if B8 <= 8:
        return 8
    half = _round_up((B8 + 1) // 2, 8)
    return min(cap, half)


def mlp_kernel(x_ref, w1_ref, b1_ref, w2_ref, b2_ref, w3_ref, b3_ref, o_ref):
    # Layer 1: H = relu(X @ W1 + b1)
    x = x_ref[...]
    h = jnp.dot(x, w1_ref[...], preferred_element_type=jnp.float32) + b1_ref[...]
    h = jnp.maximum(h, 0.0)
    # Layer 2: C = relu(H @ W2 + b2)
    c = jnp.dot(h, w2_ref[...], preferred_element_type=jnp.float32) + b2_ref[...]
    c = jnp.maximum(c, 0.0)
    # Layer 3 logits + naive softmax (padded output columns carry a -1e30 bias
    # so exp underflows to exactly 0 and does not pollute the denominator).
    logits = jnp.dot(c, w3_ref[...], preferred_element_type=jnp.float32) + b3_ref[...]
    e = jnp.exp(logits)
    denom = jnp.sum(e, axis=1, keepdims=True)
    # Exact reciprocal; approx=True would use the otherwise-idle EUP vrcp slot
    # for free but loosens agreement with the f32 reference.  Note a*(1/b) is
    # not bit-identical to a/b either; it is simply within tolerance.
    o_ref[...] = (e * pl.reciprocal(denom)).astype(o_ref.dtype)


def make_mlp_forward(W1, b1, W2, b2, W3, b3, num_inputs, tile_b_cap: int = 512):
    """Pad/cast the parameters ONCE and return a jitted forward(x) closure."""
    K = int(num_inputs)
    H1 = W1.shape[1]
    H2 = W2.shape[1]
    num_outputs = W3.shape[1]

    # Lane-dense padding of the output-feature dims (multiples of 128).  The
    # contraction dim of X (K) is intentionally NOT padded.
    H1_p = _round_up(H1, 128)
    H2_p = _round_up(H2, 128)
    O_p = _round_up(num_outputs, 128)

    W1_p = jnp.pad(W1.astype(jnp.float32), ((0, 0), (0, H1_p - H1)))
    b1_p = jnp.pad(b1.astype(jnp.float32), (0, H1_p - H1)).reshape(1, H1_p)
    W2_p = jnp.pad(W2.astype(jnp.float32), ((0, H1_p - H1), (0, H2_p - H2)))
    b2_p = jnp.pad(b2.astype(jnp.float32), (0, H2_p - H2)).reshape(1, H2_p)
    W3_p = jnp.pad(W3.astype(jnp.float32), ((0, H2_p - H2), (0, O_p - num_outputs)))
    # Padded output logits get a huge negative bias -> exp() == 0 exactly.
    b3_p = jnp.pad(
        b3.astype(jnp.float32), (0, O_p - num_outputs), constant_values=-1e30
    ).reshape(1, O_p)

    resident = lambda i: (0, 0)  # weights/biases: DMA'd once, stay VMEM-resident

    @jax.jit
    def forward(x):
        # Flatten NCHW -> (B, num_inputs), matching PyTorch X.reshape((-1, num_inputs)).
        xf = x.reshape((-1, K)).astype(jnp.float32)
        B = xf.shape[0]

        tile_b = _choose_tile_b(B, tile_b_cap)
        B_p = _round_up(B, tile_b)
        xf_p = jnp.pad(xf, ((0, B_p - B), (0, 0)))
        n_tiles = B_p // tile_b

        # VMEM budget: resident weights/biases (double-buffered by Pallas) +
        # double-buffered X/out tiles + headroom; clamp to a sane range.
        resident_bytes = 4 * (K * H1_p + H1_p + H1_p * H2_p + H2_p + H2_p * O_p + O_p)
        io_bytes = 4 * tile_b * (K + O_p)
        vmem_limit = int(min(96 << 20, max(16 << 20, 2 * (resident_bytes + io_bytes) + (8 << 20))))

        out = pl.pallas_call(
            mlp_kernel,
            out_shape=jax.ShapeDtypeStruct((B_p, O_p), jnp.float32),
            grid=(n_tiles,),
            in_specs=[
                pl.BlockSpec((tile_b, K), lambda i: (i, 0)),   # X tile (pipelined)
                pl.BlockSpec((K, H1_p), resident),             # W1
                pl.BlockSpec((1, H1_p), resident),             # b1
                pl.BlockSpec((H1_p, H2_p), resident),          # W2
                pl.BlockSpec((1, H2_p), resident),             # b2
                pl.BlockSpec((H2_p, O_p), resident),           # W3
                pl.BlockSpec((1, O_p), resident),              # b3
            ],
            out_specs=pl.BlockSpec((tile_b, O_p), lambda i: (i, 0)),
            compiler_params=pltpu.CompilerParams(
                dimension_semantics=("parallel",),
                vmem_limit_bytes=vmem_limit,
            ),
        )(xf_p, W1_p, b1_p, W2_p, b2_p, W3_p, b3_p)

        # Strip batch / output padding (skip this slice if the consumer can
        # accept the padded slab).
        return out[:B, :num_outputs]

    return forward


if __name__ == "__main__":
    # Small shapes consistent with the module: X is NCHW and flattened to num_inputs.
    batch, C, H, W = 2, 4, 4, 4
    num_inputs = C * H * W          # 64
    num_hiddens1 = 32
    num_hiddens2 = 32
    num_outputs = 16

    key = jax.random.PRNGKey(0)
    kx, k1, k2, k3 = jax.random.split(key, 4)

    x = jax.random.normal(kx, (batch, C, H, W), dtype=jnp.float32)
    W1 = jax.random.normal(k1, (num_inputs, num_hiddens1), dtype=jnp.float32) * 0.01
    b1 = jnp.zeros((num_hiddens1,), dtype=jnp.float32)
    W2 = jax.random.normal(k2, (num_hiddens1, num_hiddens2), dtype=jnp.float32) * 0.01
    b2 = jnp.zeros((num_hiddens2,), dtype=jnp.float32)
    W3 = jax.random.normal(k3, (num_hiddens2, num_outputs), dtype=jnp.float32) * 0.01
    b3 = jnp.zeros((num_outputs,), dtype=jnp.float32)

    # Parameters are padded/cast exactly once here; per-call work is minimal.
    forward = make_mlp_forward(W1, b1, W2, b2, W3, b3, num_inputs)

    out = forward(x)
    out = jax.block_until_ready(out)

    # Sanity check against a pure-JAX reference (same naive softmax as PyTorch).
    xf = x.reshape((-1, num_inputs))
    h_ref = jnp.maximum(xf @ W1 + b1, 0.0)
    c_ref = jnp.maximum(h_ref @ W2 + b2, 0.0)
    logits_ref = c_ref @ W3 + b3
    e_ref = jnp.exp(logits_ref)
    ref = e_ref / e_ref.sum(axis=1, keepdims=True)
    assert out.shape == (batch, num_outputs)
    assert jnp.allclose(out, ref, atol=1e-5, rtol=1e-5)

    print("KERNEL_OK")
</pallas_src>

<mosaic_0001>
module attributes {stable_mosaic.version = 11 : i64} {
  func.func @mlp_kernel(%arg0: i32, %arg1: memref<8x64xf32, #tpu.memory_space<vmem>>, %arg2: memref<64x128xf32, #tpu.memory_space<vmem>>, %arg3: memref<1x128xf32, #tpu.memory_space<vmem>>, %arg4: memref<128x128xf32, #tpu.memory_space<vmem>>, %arg5: memref<1x128xf32, #tpu.memory_space<vmem>>, %arg6: memref<128x128xf32, #tpu.memory_space<vmem>>, %arg7: memref<1x128xf32, #tpu.memory_space<vmem>>, %arg8: memref<8x128xf32, #tpu.memory_space<vmem>>) attributes {dimension_semantics = [#tpu.dimension_semantics<parallel>], iteration_bounds = array<i64: 1>, scalar_prefetch = 0 : i64, scratch_operands = 0 : i64, tpu.core_type = #tpu.core_type<tc>, window_params = [{transform_indices = @transform_0, window_bounds = array<i64: 8, 64>}, {pipeline_mode = #tpu.pipeline_mode<synchronous>, transform_indices = @transform_1, window_bounds = array<i64: 64, 128>}, {pipeline_mode = #tpu.pipeline_mode<synchronous>, transform_indices = @transform_2, window_bounds = array<i64: 1, 128>}, {pipeline_mode = #tpu.pipeline_mode<synchronous>, transform_indices = @transform_3, window_bounds = array<i64: 128, 128>}, {pipeline_mode = #tpu.pipeline_mode<synchronous>, transform_indices = @transform_4, window_bounds = array<i64: 1, 128>}, {pipeline_mode = #tpu.pipeline_mode<synchronous>, transform_indices = @transform_5, window_bounds = array<i64: 128, 128>}, {pipeline_mode = #tpu.pipeline_mode<synchronous>, transform_indices = @transform_6, window_bounds = array<i64: 1, 128>}, {transform_indices = @transform_7, window_bounds = array<i64: 8, 128>}]} {
    %c0 = arith.constant 0 : index
    %c0_0 = arith.constant 0 : index
    %0 = vector.load %arg1[%c0, %c0_0] : memref<8x64xf32, #tpu.memory_space<vmem>>, vector<8x64xf32>
    %c0_1 = arith.constant 0 : index
    %c0_2 = arith.constant 0 : index
    %1 = vector.load %arg2[%c0_1, %c0_2] : memref<64x128xf32, #tpu.memory_space<vmem>>, vector<64x128xf32>
    %cst = arith.constant dense<0.000000e+00> : vector<8x128xf32>
    %2 = tpu.matmul %0, %1, %cst {dimension_numbers = #tpu.dot_dimension_numbers<[1], [0], [0], [1], [0, 0, 1, 1], [], []>} : vector<8x64xf32>, vector<64x128xf32>, vector<8x128xf32> -> vector<8x128xf32>
    %c0_3 = arith.constant 0 : index
    %c0_4 = arith.constant 0 : index
    %3 = vector.load %arg3[%c0_3, %c0_4] : memref<1x128xf32, #tpu.memory_space<vmem>>, vector<1x128xf32>
    %4 = vector.broadcast %3 : vector<1x128xf32> to vector<8x128xf32>
    %5 = arith.addf %2, %4 : vector<8x128xf32>
    %cst_5 = arith.constant 0.000000e+00 : f32
    %6 = vector.broadcast %cst_5 : f32 to vector<8x128xf32>
    %7 = arith.maximumf %5, %6 : vector<8x128xf32>
    %c0_6 = arith.constant 0 : index
    %c0_7 = arith.constant 0 : index
    %8 = vector.load %arg4[%c0_6, %c0_7] : memref<128x128xf32, #tpu.memory_space<vmem>>, vector<128x128xf32>
    %cst_8 = arith.constant dense<0.000000e+00> : vector<8x128xf32>
    %9 = tpu.matmul %7, %8, %cst_8 {dimension_numbers = #tpu.dot_dimension_numbers<[1], [0], [0], [1], [0, 0, 1, 1], [], []>} : vector<8x128xf32>, vector<128x128xf32>, vector<8x128xf32> -> vector<8x128xf32>
    %c0_9 = arith.constant 0 : index
    %c0_10 = arith.constant 0 : index
    %10 = vector.load %arg5[%c0_9, %c0_10] : memref<1x128xf32, #tpu.memory_space<vmem>>, vector<1x128xf32>
    %11 = vector.broadcast %10 : vector<1x128xf32> to vector<8x128xf32>
    %12 = arith.addf %9, %11 : vector<8x128xf32>
    %cst_11 = arith.constant 0.000000e+00 : f32
    %13 = vector.broadcast %cst_11 : f32 to vector<8x128xf32>
    %14 = arith.maximumf %12, %13 : vector<8x128xf32>
    %c0_12 = arith.constant 0 : index
    %c0_13 = arith.constant 0 : index
    %15 = vector.load %arg6[%c0_12, %c0_13] : memref<128x128xf32, #tpu.memory_space<vmem>>, vector<128x128xf32>
    %cst_14 = arith.constant dense<0.000000e+00> : vector<8x128xf32>
    %16 = tpu.matmul %14, %15, %cst_14 {dimension_numbers = #tpu.dot_dimension_numbers<[1], [0], [0], [1], [0, 0, 1, 1], [], []>} : vector<8x128xf32>, vector<128x128xf32>, vector<8x128xf32> -> vector<8x128xf32>
    %c0_15 = arith.constant 0 : index
    %c0_16 = arith.constant 0 : index
    %17 = vector.load %arg7[%c0_15, %c0_16] : memref<1x128xf32, #tpu.memory_space<vmem>>, vector<1x128xf32>
    %18 = vector.broadcast %17 : vector<1x128xf32> to vector<8x128xf32>
    %19 = arith.addf %16, %18 : vector<8x128xf32>
    %20 = math.exp %19 : vector<8x128xf32>
    %cst_17 = arith.constant dense<0.000000e+00> : vector<8xf32>
    %21 = vector.multi_reduction <add>, %20, %cst_17 [1] : vector<8x128xf32> to vector<8xf32>
    %22 = vector.shape_cast %21 : vector<8xf32> to vector<8x1xf32>
    %23 = tpu.reciprocal %22 : vector<8x1xf32> -> vector<8x1xf32>
    %24 = vector.broadcast %23 : vector<8x1xf32> to vector<8x128xf32>
    %25 = arith.mulf %20, %24 : vector<8x128xf32>
    %c0_18 = arith.constant 0 : index
    %c0_19 = arith.constant 0 : index
    %26 = vector.load %arg8[%c0_18, %c0_19] : memref<8x128xf32, #tpu.memory_space<vmem>>, vector<8x128xf32>
    tpu.vector_store %arg8[%c0_18, %c0_19], %25 {strides = array<i32>} : memref<8x128xf32, #tpu.memory_space<vmem>>, vector<8x128xf32>,
    return
  }
  func.func @transform_0(%arg0: i32) -> (i32, i32) {
    %c0_i32 = arith.constant 0 : i32
    %c0_i32_0 = arith.constant 0 : i32
    return %arg0, %c0_i32 : i32, i32
  }
  func.func @transform_1(%arg0: i32) -> (i32, i32) {
    %c0_i32 = arith.constant 0 : i32
    %c0_i32_0 = arith.constant 0 : i32
    %c0_i32_1 = arith.constant 0 : i32
    return %c0_i32, %c0_i32_0 : i32, i32
  }
  func.func @transform_2(%arg0: i32) -> (i32, i32) {
    %c0_i32 = arith.constant 0 : i32
    %c0_i32_0 = arith.constant 0 : i32
    %c0_i32_1 = arith.constant 0 : i32
    return %c0_i32, %c0_i32_0 : i32, i32
  }
  func.func @transform_3(%arg0: i32) -> (i32, i32) {
    %c0_i32 = arith.constant 0 : i32
    %c0_i32_0 = arith.constant 0 : i32
    %c0_i32_1 = arith.constant 0 : i32
    return %c0_i32, %c0_i32_0 : i32, i32
  }
  func.func @transform_4(%arg0: i32) -> (i32, i32) {
    %c0_i32 = arith.constant 0 : i32
    %c0_i32_0 = arith.constant 0 : i32
    %c0_i32_1 = arith.constant 0 : i32
    return %c0_i32, %c0_i32_0 : i32, i32
  }
  func.func @transform_5(%arg0: i32) -> (i32, i32) {
    %c0_i32 = arith.constant 0 : i32
    %c0_i32_0 = arith.constant 0 : i32
    %c0_i32_1 = arith.constant 0 : i32
    return %c0_i32, %c0_i32_0 : i32, i32
  }
  func.func @transform_6(%arg0: i32) -> (i32, i32) {
    %c0_i32 = arith.constant 0 : i32
    %c0_i32_0 = arith.constant 0 : i32
    %c0_i32_1 = arith.constant 0 : i32
    return %c0_i32, %c0_i32_0 : i32, i32
  }
  func.func @transform_7(%arg0: i32) -> (i32, i32) {
    %c0_i32 = arith.constant 0 : i32
    %c0_i32_0 = arith.constant 0 : i32
    return %arg0, %c0_i32 : i32, i32
  }
}

</mosaic_0001>

<llo_original>
// kernel: forward.1
$region0: #{forward.1}
  #allocation0 [shape = 'u32[]', space=smem, size = 0x4, offset = 0x4, fixed_abs, tag = 'smem constant byte address 0x4 - core index']
  #allocation1 [shape = 'u32[144,128]{1,0:T(1,128)}', space=vmem, size = 0x12000, scoped, tag = 'internal scratch']
  %s0 = inlined_call_operand.vmem [shape: f32[8,64], index: 0, kind: input, shape index: {}]
  %s1 = inlined_call_operand.hbm [shape: f32[64,128], index: 1, kind: input, shape index: {}]
  %s2 = inlined_call_operand.vmem [shape: f32[1,128], index: 2, kind: input, shape index: {}, may-alias: {2,4}]
  %s3 = inlined_call_operand.hbm [shape: f32[128,128], index: 3, kind: input, shape index: {}]
  %s4 = inlined_call_operand.vmem [shape: f32[1,128], index: 4, kind: input, shape index: {}, may-alias: {2,4}]
  %s5 = inlined_call_operand.hbm [shape: f32[128,128], index: 5, kind: input, shape index: {}]
  %s6 = inlined_call_operand.vmem [shape: f32[1,128], index: 6, kind: input, shape index: {}]
  %s7 = inlined_call_operand.vmem [shape: f32[8,128], index: 7, kind: output, shape index: {}]
  %s8 = sld [smem:[#allocation0]]
  $region50: #{forward.1} parent=0
    _
  %s10 = ssub.s32 1, %s8
  %s11 = scalar_select 0, %s10, %s8
  $region1: #{forward.1} parent=0
    #allocation2 [shape = 'u8[32768]{0}', space=vmem, size = 0x8000, scoped, tag = 'input window, operand 1, single buffered']
    #allocation3 [shape = 's32[1]{0}', space=sflag, size = 0x4, scoped, tag = 'scoped memory for forward.1']
    #allocation4 [shape = 'u8[65536]{0}', space=vmem, size = 0x10000, scoped, tag = 'input window, operand 3, single buffered']
    #allocation5 [shape = 's32[1]{0}', space=sflag, size = 0x4, scoped, tag = 'scoped memory for forward.1']
    #allocation6 [shape = 'u8[65536]{0}', space=vmem, size = 0x10000, scoped, tag = 'input window, operand 5, single buffered']
    %12 = vsyncpa [#allocation3], 0
    %13 = vsyncpa [#allocation5], 0
    // Predicated region
    $region2: #{forward.1} parent=1 // pred_check
      _
    $region3: #{forward.1} parent=1 // pred_check_branch
      %15 = sbr.rel (0) target = $region5
    $region4: #{forward.1} parent=1 // pred_region
      _
    $region5: #{forward.1} parent=1 // pred_fallthru
      _
    // Predicated region
    $region6: #{forward.1} parent=1 // pred_check
      _
    $region7: #{forward.1} parent=1 // pred_check_branch
      %17 = sbr.rel (0) target = $region9
    $region8: #{forward.1} parent=1 // pred_region
      %s19 = ssub.s32 1024, 1024
      %20 = vsyncadd [#allocation3], %s19
      %s21 = sshll.u32 [#allocation2], 4
      %s22 = int_to_ptr.vmem [resolvable:$true] %s21
      %27 = dma.hbm_to_vmem [thread:$0]  %s1, 1024, %s22, [#allocation3], 128, 128, 8
    $region9: #{forward.1} parent=1 // pred_fallthru
      _
    // Predicated region
    $region10: #{forward.1} parent=1 // pred_check
      _
    $region11: #{forward.1} parent=1 // pred_check_branch
      %29 = sbr.rel (0) target = $region13
    $region12: #{forward.1} parent=1 // pred_region
      _
    $region13: #{forward.1} parent=1 // pred_fallthru
      _
    // Predicated region
    $region14: #{forward.1} parent=1 // pred_check
      _
    $region15: #{forward.1} parent=1 // pred_check_branch
      %31 = sbr.rel (0) target = $region17
    $region16: #{forward.1} parent=1 // pred_region
      %s33 = ssub.s32 2048, 2048
      %34 = vsyncadd [#allocation5], %s33
      %s35 = sshll.u32 [#allocation4], 4
      %s36 = int_to_ptr.vmem [resolvable:$true] %s35
      %41 = dma.hbm_to_vmem [thread:$0]  %s3, 2048, %s36, [#allocation5], 128, 128, 8
    $region17: #{forward.1} parent=1 // pred_fallthru
      _
    // Predicated region
    $region18: #{forward.1} parent=1 // pred_check
      _
    $region19: #{forward.1} parent=1 // pred_check_branch
      %43 = sbr.rel (0) target = $region21
    $region20: #{forward.1} parent=1 // pred_region
      _
    $region21: #{forward.1} parent=1 // pred_fallthru
      _
    // Predicated region
    $region22: #{forward.1} parent=1 // pred_check
      _
    $region23: #{forward.1} parent=1 // pred_check_branch
      %45 = sbr.rel (0) target = $region25
    $region24: #{forward.1} parent=1 // pred_region
      %s47 = ssub.s32 2048, 2048
      %48 = vsyncadd [#allocation5], %s47
      %s49 = sshll.u32 [#allocation6], 4
      %s50 = int_to_ptr.vmem [resolvable:$true] %s49
      %55 = dma.hbm_to_vmem [thread:$0]  %s5, 2048, %s50, [#allocation5], 128, 128, 8
    $region25: #{forward.1} parent=1 // pred_fallthru
      _
    // Predicated region
    $region26: #{forward.1} parent=1 // pred_check
      _
    $region27: #{forward.1} parent=1 // pred_check_branch
      %57 = sbr.rel (0) target = $region29
    $region28: #{forward.1} parent=1 // pred_region
      _
    $region29: #{forward.1} parent=1 // pred_fallthru
      _
    // Predicated region
    $region30: #{forward.1} parent=1 // pred_check
      _
    $region31: #{forward.1} parent=1 // pred_check_branch
      %59 = sbr.rel (0) target = $region33
    $region32: #{forward.1} parent=1 // pred_region
      %60 = dma.done [#allocation3], 1024
    $region33: #{forward.1} parent=1 // pred_fallthru
      _
    // Predicated region
    $region34: #{forward.1} parent=1 // pred_check
      _
    $region35: #{forward.1} parent=1 // pred_check_branch
      %62 = sbr.rel (0) target = $region37
    $region36: #{forward.1} parent=1 // pred_region
      %63 = dma.done [#allocation5], 2048
    $region37: #{forward.1} parent=1 // pred_fallthru
      _
    // Predicated region
    $region38: #{forward.1} parent=1 // pred_check
      _
    $region39: #{forward.1} parent=1 // pred_check_branch
      %65 = sbr.rel (0) target = $region41
    $region40: #{forward.1} parent=1 // pred_region
      %66 = dma.done [#allocation5], 2048
    $region41: #{forward.1} parent=1 // pred_fallthru
      _
    %v67 = vld [vmem:[%s0] sm:$0xff]
    %v68 = vld [vmem:[#allocation2] sm:$0xff]
    %v69 = vld [vmem:[#allocation2 + $0x8] sm:$0xff]
    %v70 = vld [vmem:[#allocation2 + $0x10] sm:$0xff]
    %v71 = vld [vmem:[#allocation2 + $0x18] sm:$0xff]
    %v72 = vld [vmem:[#allocation2 + $0x20] sm:$0xff]
    %v73 = vld [vmem:[#allocation2 + $0x28] sm:$0xff]
    %v74 = vld [vmem:[#allocation2 + $0x30] sm:$0xff]
    %v75 = vld [vmem:[#allocation2 + $0x38] sm:$0xff]
    %v76 = vld [vmem:[%s2] sm:$0x1]
    %v78 = vlaneseq
    %v79 = vshrl.u32 %v78, 7
    %v80 = vsub.s32 0, %v79
    %v81 = vrot.slane %v76, %v80
    %vm83 = vcmask 523264
    %v85 = vsel %vm83, %v67, 0
    %87 = vmatprep.subr.mxu0 0.0
    %88 = vmatpush1.msra.mxu0 %v68
    %89 = vmatprep.subr.mxu0 0.0
    %90 = vmatpush1.msra.mxu0 %v69
    %91 = vmatprep.subr.mxu0 0.0
    %92 = vmatpush1.msra.mxu0 %v70
    %93 = vmatprep.subr.mxu0 0.0
    %94 = vmatpush1.msra.mxu0 %v71
    %95 = vmatprep.subr.mxu0 0.0
    %96 = vmatpush1.msra.mxu0 %v72
    %97 = vmatprep.subr.mxu0 0.0
    %98 = vmatpush1.msra.mxu0 %v73
    %99 = vmatprep.subr.mxu0 0.0
    %100 = vmatpush1.msra.mxu0 %v74
    %101 = vmatprep.subr.mxu0 0.0
    %102 = vmatpush1.msra.mxu0 %v75
    %103 = vmatprep.subr.mxu0 0.0
    %104 = vmatpush1.msra.mxu0 0.0
    %105 = vmatprep.subr.mxu0 0.0
    %106 = vmatpush1.msra.mxu0 0.0
    %107 = vmatprep.subr.mxu0 0.0
    %108 = vmatpush1.msra.mxu0 0.0
    %109 = vmatprep.subr.mxu0 0.0
    %110 = vmatpush1.msra.mxu0 0.0
    %111 = vmatprep.subr.mxu0 0.0
    %112 = vmatpush1.msra.mxu0 0.0
    %113 = vmatprep.subr.mxu0 0.0
    %114 = vmatpush1.msra.mxu0 0.0
    %115 = vmatprep.subr.mxu0 0.0
    %116 = vmatpush1.msra.mxu0 0.0
    %117 = vmatprep.subr.mxu0 0.0
    %118 = vmatpush1.msra.mxu0 0.0
    %119 = vmatprep.subr.mxu0 0.0
    %120 = vmatpush1.msra.mxu0 0.0
    %121 = vmatprep.subr.mxu0 0.0
    %122 = vmatpush1.msra.mxu0 0.0
    %123 = vmatprep.subr.mxu0 0.0
    %124 = vmatpush1.msra.mxu0 0.0
    %125 = vmatprep.subr.mxu0 0.0
    %126 = vmatpush1.msra.mxu0 0.0
    %127 = vmatprep.subr.mxu0 0.0
    %128 = vmatpush1.msra.mxu0 0.0
    %129 = vmatprep.subr.mxu0 0.0
    %130 = vmatpush1.msra.mxu0 0.0
    %131 = vmatprep.subr.mxu0 0.0
    %132 = vmatpush1.msra.mxu0 0.0
    %133 = vmatprep.subr.mxu0 0.0
    %134 = vmatpush1.msra.mxu0 0.0
    %135 = vmatprep.subr.mxu0 0.0
    %136 = vmatpush1.msra.mxu0 0.0
    %137 = vmatprep.subr.mxu0 0.0
    %138 = vmatpush1.msra.mxu0 0.0
    %139 = vmatprep.subr.mxu0 0.0
    %140 = vmatpush1.msra.mxu0 0.0
    %141 = vmatprep.subr.mxu0 0.0
    %142 = vmatpush1.msra.mxu0 0.0
    %143 = vmatprep.subr.mxu0 0.0
    %144 = vmatpush1.msra.mxu0 0.0
    %145 = vmatprep.subr.mxu0 0.0
    %146 = vmatpush1.msra.mxu0 0.0
    %147 = vmatprep.subr.mxu0 0.0
    %148 = vmatpush1.msra.mxu0 0.0
    %149 = vmatprep.subr.mxu0 0.0
    %150 = vmatpush1.msra.mxu0 0.0
    %151 = vmatprep.mubr.f32.mxu0 0.0
    %152 = vmatmul.mubr.f32.gmra.mrb[0].mxu0 %v85
    %v153 = vpop.f32.mrb[0].mxu0
    %v154 = vadd.f32 %v81, %v153
    %v155 = vpop.f32.mrb[0].mxu0
    %156 = vdwg.mxu0
    %v157 = vmax.f32 %v154, 0.0
    %v158 = vld [vmem:[#allocation4] sm:$0xff]
    %v159 = vld [vmem:[#allocation4 + $0x8] sm:$0xff]
    %v160 = vld [vmem:[#allocation4 + $0x10] sm:$0xff]
    %v161 = vld [vmem:[#allocation4 + $0x18] sm:$0xff]
    %v162 = vld [vmem:[#allocation4 + $0x20] sm:$0xff]
    %v163 = vld [vmem:[#allocation4 + $0x28] sm:$0xff]
    %v164 = vld [vmem:[#allocation4 + $0x30] sm:$0xff]
    %v165 = vld [vmem:[#allocation4 + $0x38] sm:$0xff]
    %v166 = vld [vmem:[#allocation4 + $0x40] sm:$0xff]
    %v167 = vld [vmem:[#allocation4 + $0x48] sm:$0xff]
    %v168 = vld [vmem:[#allocation4 + $0x50] sm:$0xff]
    %v169 = vld [vmem:[#allocation4 + $0x58] sm:$0xff]
    %v170 = vld [vmem:[#allocation4 + $0x60] sm:$0xff]
    %v171 = vld [vmem:[#allocation4 + $0x68] sm:$0xff]
    %v172 = vld [vmem:[#allocation4 + $0x70] sm:$0xff]
    %v173 = vld [vmem:[#allocation4 + $0x78] sm:$0xff]
    %v174 = vld [vmem:[%s4] sm:$0x1]
    %v176 = vlaneseq
    %v177 = vshrl.u32 %v176, 7
    %v178 = vsub.s32 0, %v177
    %v179 = vrot.slane %v174, %v178
    %181 = vmatprep.subr.mxu0 0.0
    %182 = vmatpush1.msra.mxu0 %v158
    %183 = vmatprep.subr.mxu0 0.0
    %184 = vmatpush1.msra.mxu0 %v159
    %185 = vmatprep.subr.mxu0 0.0
    %186 = vmatpush1.msra.mxu0 %v160
    %187 = vmatprep.subr.mxu0 0.0
    %188 = vmatpush1.msra.mxu0 %v161
    %189 = vmatprep.subr.mxu0 0.0
    %190 = vmatpush1.msra.mxu0 %v162
    %191 = vmatprep.subr.mxu0 0.0
    %192 = vmatpush1.msra.mxu0 %v163
    %193 = vmatprep.subr.mxu0 0.0
    %194 = vmatpush1.msra.mxu0 %v164
    %195 = vmatprep.subr.mxu0 0.0
    %196 = vmatpush1.msra.mxu0 %v165
    %197 = vmatprep.subr.mxu0 0.0
    %198 = vmatpush1.msra.mxu0 %v166
    %199 = vmatprep.subr.mxu0 0.0
    %200 = vmatpush1.msra.mxu0 %v167
    %201 = vmatprep.subr.mxu0 0.0
    %202 = vmatpush1.msra.mxu0 %v168
    %203 = vmatprep.subr.mxu0 0.0
    %204 = vmatpush1.msra.mxu0 %v169
    %205 = vmatprep.subr.mxu0 0.0
    %206 = vmatpush1.msra.mxu0 %v170
    %207 = vmatprep.subr.mxu0 0.0
    %208 = vmatpush1.msra.mxu0 %v171
    %209 = vmatprep.subr.mxu0 0.0
    %210 = vmatpush1.msra.mxu0 %v172
    %211 = vmatprep.subr.mxu0 0.0
    %212 = vmatpush1.msra.mxu0 %v173
    %213 = vmatprep.subr.mxu0 0.0
    %214 = vmatpush1.msra.mxu0 0.0
    %215 = vmatprep.subr.mxu0 0.0
    %216 = vmatpush1.msra.mxu0 0.0
    %217 = vmatprep.subr.mxu0 0.0
    %218 = vmatpush1.msra.mxu0 0.0
    %219 = vmatprep.subr.mxu0 0.0
    %220 = vmatpush1.msra.mxu0 0.0
    %221 = vmatprep.subr.mxu0 0.0
    %222 = vmatpush1.msra.mxu0 0.0
    %223 = vmatprep.subr.mxu0 0.0
    %224 = vmatpush1.msra.mxu0 0.0
    %225 = vmatprep.subr.mxu0 0.0
    %226 = vmatpush1.msra.mxu0 0.0
    %227 = vmatprep.subr.mxu0 0.0
    %228 = vmatpush1.msra.mxu0 0.0
    %229 = vmatprep.subr.mxu0 0.0
    %230 = vmatpush1.msra.mxu0 0.0
    %231 = vmatprep.subr.mxu0 0.0
    %232 = vmatpush1.msra.mxu0 0.0
    %233 = vmatprep.subr.mxu0 0.0
    %234 = vmatpush1.msra.mxu0 0.0
    %235 = vmatprep.subr.mxu0 0.0
    %236 = vmatpush1.msra.mxu0 0.0
    %237 = vmatprep.subr.mxu0 0.0
    %238 = vmatpush1.msra.mxu0 0.0
    %239 = vmatprep.subr.mxu0 0.0
    %240 = vmatpush1.msra.mxu0 0.0
    %241 = vmatprep.subr.mxu0 0.0
    %242 = vmatpush1.msra.mxu0 0.0
    %243 = vmatprep.subr.mxu0 0.0
    %244 = vmatpush1.msra.mxu0 0.0
    %245 = vmatprep.mubr.f32.mxu0 0.0
    %246 = vmatmul.mubr.f32.gmra.mrb[0].mxu0 %v157
    %v247 = vpop.f32.mrb[0].mxu0
    %v248 = vadd.f32 %v179, %v247
    %v249 = vpop.f32.mrb[0].mxu0
    %250 = vdwg.mxu0
    %v251 = vmax.f32 %v248, 0.0
    %v252 = vld [vmem:[#allocation6] sm:$0xff]
    %v253 = vld [vmem:[#allocation6 + $0x8] sm:$0xff]
    %v254 = vld [vmem:[#allocation6 + $0x10] sm:$0xff]
    %v255 = vld [vmem:[#allocation6 + $0x18] sm:$0xff]
    %v256 = vld [vmem:[#allocation6 + $0x20] sm:$0xff]
    %v257 = vld [vmem:[#allocation6 + $0x28] sm:$0xff]
    %v258 = vld [vmem:[#allocation6 + $0x30] sm:$0xff]
    %v259 = vld [vmem:[#allocation6 + $0x38] sm:$0xff]
    %v260 = vld [vmem:[#allocation6 + $0x40] sm:$0xff]
    %v261 = vld [vmem:[#allocation6 + $0x48] sm:$0xff]
    %v262 = vld [vmem:[#allocation6 + $0x50] sm:$0xff]
    %v263 = vld [vmem:[#allocation6 + $0x58] sm:$0xff]
    %v264 = vld [vmem:[#allocation6 + $0x60] sm:$0xff]
    %v265 = vld [vmem:[#allocation6 + $0x68] sm:$0xff]
    %v266 = vld [vmem:[#allocation6 + $0x70] sm:$0xff]
    %v267 = vld [vmem:[#allocation6 + $0x78] sm:$0xff]
    %v268 = vld [vmem:[%s6] sm:$0x1]
    %v270 = vlaneseq
    %v271 = vshrl.u32 %v270, 7
    %v272 = vsub.s32 0, %v271
    %v273 = vrot.slane %v268, %v272
    %275 = vmatprep.subr.mxu0 0.0
    %276 = vmatpush1.msra.mxu0 %v252
    %277 = vmatprep.subr.mxu0 0.0
    %278 = vmatpush1.msra.mxu0 %v253
    %279 = vmatprep.subr.mxu0 0.0
    %280 = vmatpush1.msra.mxu0 %v254
    %281 = vmatprep.subr.mxu0 0.0
    %282 = vmatpush1.msra.mxu0 %v255
    %283 = vmatprep.subr.mxu0 0.0
    %284 = vmatpush1.msra.mxu0 %v256
    %285 = vmatprep.subr.mxu0 0.0
    %286 = vmatpush1.msra.mxu0 %v257
    %287 = vmatprep.subr.mxu0 0.0
    %288 = vmatpush1.msra.mxu0 %v258
    %289 = vmatprep.subr.mxu0 0.0
    %290 = vmatpush1.msra.mxu0 %v259
    %291 = vmatprep.subr.mxu0 0.0
    %292 = vmatpush1.msra.mxu0 %v260
    %293 = vmatprep.subr.mxu0 0.0
    %294 = vmatpush1.msra.mxu0 %v261
    %295 = vmatprep.subr.mxu0 0.0
    %296 = vmatpush1.msra.mxu0 %v262
    %297 = vmatprep.subr.mxu0 0.0
    %298 = vmatpush1.msra.mxu0 %v263
    %299 = vmatprep.subr.mxu0 0.0
    %300 = vmatpush1.msra.mxu0 %v264
    %301 = vmatprep.subr.mxu0 0.0
    %302 = vmatpush1.msra.mxu0 %v265
    %303 = vmatprep.subr.mxu0 0.0
    %304 = vmatpush1.msra.mxu0 %v266
    %305 = vmatprep.subr.mxu0 0.0
    %306 = vmatpush1.msra.mxu0 %v267
    %307 = vmatprep.subr.mxu0 0.0
    %308 = vmatpush1.msra.mxu0 0.0
    %309 = vmatprep.subr.mxu0 0.0
    %310 = vmatpush1.msra.mxu0 0.0
    %311 = vmatprep.subr.mxu0 0.0
    %312 = vmatpush1.msra.mxu0 0.0
    %313 = vmatprep.subr.mxu0 0.0
    %314 = vmatpush1.msra.mxu0 0.0
    %315 = vmatprep.subr.mxu0 0.0
    %316 = vmatpush1.msra.mxu0 0.0
    %317 = vmatprep.subr.mxu0 0.0
    %318 = vmatpush1.msra.mxu0 0.0
    %319 = vmatprep.subr.mxu0 0.0
    %320 = vmatpush1.msra.mxu0 0.0
    %321 = vmatprep.subr.mxu0 0.0
    %322 = vmatpush1.msra.mxu0 0.0
    %323 = vmatprep.subr.mxu0 0.0
    %324 = vmatpush1.msra.mxu0 0.0
    %325 = vmatprep.subr.mxu0 0.0
    %326 = vmatpush1.msra.mxu0 0.0
    %327 = vmatprep.subr.mxu0 0.0
    %328 = vmatpush1.msra.mxu0 0.0
    %329 = vmatprep.subr.mxu0 0.0
    %330 = vmatpush1.msra.mxu0 0.0
    %331 = vmatprep.subr.mxu0 0.0
    %332 = vmatpush1.msra.mxu0 0.0
    %333 = vmatprep.subr.mxu0 0.0
    %334 = vmatpush1.msra.mxu0 0.0
    %335 = vmatprep.subr.mxu0 0.0
    %336 = vmatpush1.msra.mxu0 0.0
    %337 = vmatprep.subr.mxu0 0.0
    %338 = vmatpush1.msra.mxu0 0.0
    %339 = vmatprep.mubr.f32.mxu0 0.0
    %340 = vmatmul.mubr.f32.gmra.mrb[0].mxu0 %v251
    %v341 = vpop.f32.mrb[0].mxu0
    %v342 = vadd.f32 %v273, %v341
    %v343 = vpop.f32.mrb[0].mxu0
    %344 = vdwg.mxu0
    %v345 = vmul.f32 %v342, 1.442695
    %v346 = vpow.pop %v345
    %347 = vadd.xlane.f32.xlu0 %v346
    %v348 = vpop.xlane.xlu0 %347
    %v349 = vrcp.pop %v348
    %v350 = vmul.f32 %v346, %v349
    %351 = vst [vmem:[%s7] sm:$0xff] %v350
    // Predicated region
    $region42: #{forward.1} parent=1 // pred_check
      _
    $region43: #{forward.1} parent=1 // pred_check_branch
      %353 = sbr.rel (0) target = $region45
    $region44: #{forward.1} parent=1 // pred_region
      _
    $region45: #{forward.1} parent=1 // pred_fallthru
      _
    // Predicated region
    $region46: #{forward.1} parent=1 // pred_check
      _
    $region47: #{forward.1} parent=1 // pred_check_branch
      %355 = sbr.rel (0) target = $region49
    $region48: #{forward.1} parent=1 // pred_region
      _
    $region49: #{forward.1} parent=1 // pred_fallthru
      _
    %356 = vsyncpa [#allocation3], 1
    %357 = vsyncpa [#allocation5], 1

</llo_original>
